<compile_context>
chip_gen: v5e
topology: v5e:2x2
jax: 0.10.0
libtpu: 0.0.40
codegen_flags: <defaults>
</compile_context>

<pallas_src>
import functools

import jax
import jax.numpy as jnp
from jax import lax
from jax.experimental import pallas as pl
from jax.experimental.pallas import tpu as pltpu


def _cdiv(a, b):
    return -(-a // b)


def _round_up(v, m):
    return _cdiv(v, m) * m


def _vmem_capacity_bytes():
    """Physical VMEM of the attached TPU (conservative 64 MiB fallback)."""
    try:
        info = pltpu.get_tpu_info()
        cap = getattr(info, "vmem_capacity_bytes", None)
        if cap:
            return int(cap)
    except Exception:
        pass
    return 64 * 2**20  # v7x-sized fallback: safe on every generation


def _prototype_kernel(x_ref, c_ref, c2_ref, o_ref, acc_ref, *, tau, use_bf16_dot):
    # x_ref:   (TB, TK)   batch x feature tile
    # c_ref:   (TC, TK)   cluster tile
    # c2_ref:  (1, TC)    precomputed full-D squared norms of the cluster rows
    # o_ref:   (TB, TC)   similarity output tile (lane-dense)
    # acc_ref: (TB, TC)   f32 accumulator of ||x||^2 - 2 x.c over K tiles
    k = pl.program_id(2)
    nk = pl.num_programs(2)

    @pl.when(k == 0)
    def _init():
        acc_ref[...] = jnp.zeros_like(acc_ref)

    x = x_ref[...]
    c = c_ref[...]
    xf = x.astype(jnp.float32)

    # Partial ||x||^2 for this K tile (XLU reduce over the small tile only).
    x2 = jnp.sum(xf * xf, axis=-1, keepdims=True)                      # (TB, 1)

    if use_bf16_dot:
        # Regime-dependent win on v5e/v6e for large D; worsens cancellation.
        xd = x.astype(jnp.bfloat16)
        cd = c.astype(jnp.bfloat16)
    else:
        xd = xf
        cd = c.astype(jnp.float32)

    # Cross term on the MXU, contracting the feature dim of both operands
    # directly (no per-iteration transpose of the cluster tile).
    xc = lax.dot_general(
        xd, cd,
        dimension_numbers=(((1,), (1,)), ((), ())),
        preferred_element_type=jnp.float32,
    )                                                                   # (TB, TC)

    acc_ref[...] += x2 - 2.0 * xc

    @pl.when(k == nk - 1)
    def _finalize():
        dist = acc_ref[...] + c2_ref[...]
        dist = jnp.maximum(dist, 0.0)  # guard tiny negatives from cancellation

        inv_tau = 1.0 / float(tau)
        base = 1.0 + dist * inv_tau

        half_exp = (float(tau) + 1.0) / 2.0
        if half_exp > 0 and float(half_exp).is_integer() and int(half_exp) <= 8:
            # Integer-power fast path (tau=1.0 -> exponent 1): VPU multiplies
            # + one exact reciprocal, no exp/log pair on the EUP.
            n = int(half_exp)
            p = base
            for _ in range(n - 1):
                p = p * base
            sim = pl.reciprocal(p, approx=False)
        else:
            sim = jnp.power(base, -half_exp)

        o_ref[...] = sim.astype(o_ref.dtype)


def _pick_tiles(B, C, D, budget_bytes, single_buffer):
    """Choose (tile_b, tile_c, tile_k) fitting the VMEM budget."""
    # --- Batch tile: balanced around a 512-row target, >= ~4 grid steps -----
    B8 = _round_up(max(B, 8), 8)
    nb = max(1, _cdiv(B, 512))
    tile_b = min(B8, _round_up(_cdiv(B, nb), 8))
    while _cdiv(B, tile_b) < 4:
        nb += 1
        cand = _round_up(_cdiv(B, nb), 8)
        if cand < 128:
            break  # don't shrink below a decent MXU M dim just for depth
        tile_b = cand
    tile_b = max(8, min(tile_b, B8))

    C_pad0 = _round_up(max(C, 128), 128)
    c_cands = [C_pad0] + [c for c in (1024, 512, 256, 128) if c < C_pad0]
    k_cands = [D] + [k for k in (4096, 2048, 1024, 512, 256, 128) if k < D]

    def est(tb, tc, tk):
        nc = _cdiv(C, tc)
        nk = _cdiv(D, tk)
        cbuf = 1 if (single_buffer and nc == 1 and nk == 1) else 2
        c2buf = 1 if (single_buffer and nc == 1) else 2
        return 4 * (2 * tb * tk          # x tile, double-buffered
                    + cbuf * tc * tk     # cluster tile
                    + c2buf * tc         # cluster norms row
                    + 2 * tb * tc        # output tile, double-buffered
                    + tb * tc)           # f32 accumulator scratch

    chosen = None
    tb = tile_b
    while chosen is None:
        # Prefer: whole C (lane-wide output, cluster fetched once) with the
        # largest K tile that fits; then tile C; shrink tile_b only last.
        for tc in c_cands:
            for tk in k_cands:
                if est(tb, tc, tk) <= budget_bytes:
                    chosen = (tb, tc, tk)
                    break
            if chosen is not None:
                break
        if chosen is None:
            if tb > 8:
                tb = max(8, _round_up(tb // 2, 8))
            else:
                chosen = (tb, c_cands[-1], k_cands[-1])  # best effort
    return chosen


def _run(x, cluster, tau, *, budget_bytes, phys_bytes, single_buffer,
         out_dtype, use_bf16_dot):
    B, D = x.shape
    C, _ = cluster.shape

    tile_b, tile_c, tile_k = _pick_tiles(B, C, D, budget_bytes, single_buffer)

    B_pad = _round_up(B, tile_b)
    C_pad = _round_up(max(C, tile_c), tile_c)
    D_pad = _round_up(D, tile_k)

    nb = B_pad // tile_b
    nc = C_pad // tile_c
    nk = D_pad // tile_k

    x_p = x.astype(jnp.float32)
    c_p = cluster.astype(jnp.float32)
    if (B_pad, D_pad) != (B, D):
        x_p = jnp.pad(x_p, ((0, B_pad - B), (0, D_pad - D)))
    if (C_pad, D_pad) != (C, D):
        c_p = jnp.pad(c_p, ((0, C_pad - C), (0, D_pad - D)))

    # Hoisted cluster squared norms over the full feature dim (computed once).
    c2 = jnp.sum(jnp.square(c_p), axis=-1)[None, :]                    # (1, C_pad)

    # --- BlockSpecs: single-buffer the grid-invariant inputs ----------------
    cluster_invariant = nc == 1 and nk == 1
    c2_invariant = nc == 1

    c_kwargs = {}
    c2_kwargs = {}
    if single_buffer and cluster_invariant:
        c_kwargs = dict(pipeline_mode=pl.Buffered(1))
    if single_buffer and c2_invariant:
        c2_kwargs = dict(pipeline_mode=pl.Buffered(1))

    x_spec = pl.BlockSpec((tile_b, tile_k), lambda c, b, k: (b, k))
    c_spec = pl.BlockSpec((tile_c, tile_k), lambda c, b, k: (c, k), **c_kwargs)
    c2_spec = pl.BlockSpec((1, tile_c), lambda c, b, k: (0, c), **c2_kwargs)
    o_spec = pl.BlockSpec((tile_b, tile_c), lambda c, b, k: (b, c))

    # Actual VMEM estimate for this configuration + headroom.
    cbuf = 1 if (single_buffer and cluster_invariant) else 2
    c2buf = 1 if (single_buffer and c2_invariant) else 2
    est = 4 * (2 * tile_b * tile_k + cbuf * tile_c * tile_k + c2buf * tile_c
               + 2 * tile_b * tile_c + tile_b * tile_c)
    vmem_limit = int(min(0.9 * phys_bytes, max(est + (4 << 20), 32 << 20)))

    kernel = functools.partial(
        _prototype_kernel, tau=float(tau), use_bf16_dot=bool(use_bf16_dot))

    out = pl.pallas_call(
        kernel,
        out_shape=jax.ShapeDtypeStruct((B_pad, C_pad), out_dtype),
        grid_spec=pltpu.PrefetchScalarGridSpec(
            num_scalar_prefetch=0,
            grid=(nc, nb, nk),
            in_specs=[x_spec, c_spec, c2_spec],
            out_specs=o_spec,
            scratch_shapes=[pltpu.VMEM((tile_b, tile_c), jnp.float32)],
        ),
        compiler_params=pltpu.CompilerParams(
            dimension_semantics=("parallel", "parallel", "arbitrary"),
            vmem_limit_bytes=vmem_limit,
        ),
    )(x_p, c_p, c2)

    return out[:B, :C]


def prototype_forward(x, cluster, tau=1.0, *, out_dtype=None,
                      use_bf16_dot=False):
    """x: (B, D), cluster: (C, D) -> sim: (B, C).

    out_dtype: set to jnp.bfloat16 to halve the dominant output HBM stream
    if the consumer tolerates it (default float32, matching the reference).
    use_bf16_dot: cast the dot_general operands to bf16 (faster MXU on
    v5e/v6e for large D; worsens cancellation, keep False for 1e-5 accuracy).
    """
    B, D = x.shape
    C, D2 = cluster.shape
    assert D == D2, "feature dims of x and cluster must match"

    out_dtype = jnp.float32 if out_dtype is None else jnp.dtype(out_dtype)

    phys = _vmem_capacity_bytes()
    budget = int(0.65 * phys)  # ~41 MiB on v7x (64 MiB), ~83 MiB on v5e/v6e

    common = dict(budget_bytes=budget, phys_bytes=phys,
                  out_dtype=out_dtype, use_bf16_dot=use_bf16_dot)
    try:
        return _run(x, cluster, tau, single_buffer=True, **common)
    except Exception:
        # Fallback if this JAX build rejects pipeline_mode=pl.Buffered(1);
        # identical kernel, default double-buffering (tiles re-picked to fit).
        return _run(x, cluster, tau, single_buffer=False, **common)


def _xavier_uniform(key, shape, dtype=jnp.float32):
    # nn.init.xavier_uniform_ for a 2-D tensor (fan_out, fan_in) = shape
    fan_out, fan_in = shape
    bound = (6.0 / (fan_in + fan_out)) ** 0.5
    return jax.random.uniform(key, shape, dtype, minval=-bound, maxval=bound)


if __name__ == "__main__":
    num_classes = 4
    input_size = 32
    batch = 8
    tau = 1.0

    key = jax.random.PRNGKey(0)
    k_x, k_c = jax.random.split(key)

    x = jax.random.normal(k_x, (batch, input_size), dtype=jnp.float32)
    cluster = _xavier_uniform(k_c, (num_classes, input_size))

    sim = prototype_forward(x, cluster, tau)
    sim = jax.block_until_ready(sim)

    # Pure-JAX reference (mirrors the PyTorch forward exactly).
    dist_ref = jnp.sum(jnp.square(x[:, None, :] - cluster[None, :, :]), axis=2)
    sim_ref = 1.0 / (1.0 + dist_ref / tau) ** ((tau + 1.0) / 2.0)

    assert sim.shape == (batch, num_classes)
    assert jnp.allclose(sim, sim_ref, atol=1e-5, rtol=1e-5)
    print("KERNEL_OK")
</pallas_src>

<mosaic_0001>
module attributes {stable_mosaic.version = 11 : i64} {
  func.func @_prototype_kernel(%arg0: i32, %arg1: i32, %arg2: i32, %arg3: memref<8x32xf32, #tpu.memory_space<vmem>>, %arg4: memref<128x32xf32, #tpu.memory_space<vmem>>, %arg5: memref<1x128xf32, #tpu.memory_space<vmem>>, %arg6: memref<8x128xf32, #tpu.memory_space<vmem>>, %arg7: memref<8x128xf32, #tpu.memory_space<vmem>>) attributes {dimension_semantics = [#tpu.dimension_semantics<parallel>, #tpu.dimension_semantics<parallel>, #tpu.dimension_semantics<arbitrary>], iteration_bounds = array<i64: 1, 1, 1>, scalar_prefetch = 0 : i64, scratch_operands = 1 : i64, tpu.core_type = #tpu.core_type<tc>, window_params = [{transform_indices = @transform_0, window_bounds = array<i64: 8, 32>}, {pipeline_mode = #tpu.pipeline_mode<synchronous>, transform_indices = @transform_1, window_bounds = array<i64: 128, 32>}, {pipeline_mode = #tpu.pipeline_mode<synchronous>, transform_indices = @transform_2, window_bounds = array<i64: 1, 128>}, {transform_indices = @transform_3, window_bounds = array<i64: 8, 128>}]} {
    %c0_i32 = arith.constant 0 : i32
    %0 = arith.cmpi eq, %arg2, %c0_i32 : i32
    %1 = arith.extui %0 : i1 to i32
    %c0_i32_0 = arith.constant 0 : i32
    %2 = arith.cmpi ne, %1, %c0_i32_0 : i32
    scf.if %2 {
      %cst_12 = arith.constant 0.000000e+00 : f32
      %19 = vector.broadcast %cst_12 : f32 to vector<8x128xf32>
      %c0_13 = arith.constant 0 : index
      %c0_14 = arith.constant 0 : index
      %20 = vector.load %arg7[%c0_13, %c0_14] : memref<8x128xf32, #tpu.memory_space<vmem>>, vector<8x128xf32>
      tpu.vector_store %arg7[%c0_13, %c0_14], %19 {strides = array<i32>} : memref<8x128xf32, #tpu.memory_space<vmem>>, vector<8x128xf32>,
    } else {
    }
    %c0 = arith.constant 0 : index
    %c0_1 = arith.constant 0 : index
    %3 = vector.load %arg3[%c0, %c0_1] : memref<8x32xf32, #tpu.memory_space<vmem>>, vector<8x32xf32>
    %c0_2 = arith.constant 0 : index
    %c0_3 = arith.constant 0 : index
    %4 = vector.load %arg4[%c0_2, %c0_3] : memref<128x32xf32, #tpu.memory_space<vmem>>, vector<128x32xf32>
    %5 = arith.mulf %3, %3 : vector<8x32xf32>
    %cst = arith.constant dense<0.000000e+00> : vector<8xf32>
    %6 = vector.multi_reduction <add>, %5, %cst [1] : vector<8x32xf32> to vector<8xf32>
    %7 = vector.shape_cast %6 : vector<8xf32> to vector<8x1xf32>
    %cst_4 = arith.constant dense<0.000000e+00> : vector<8x128xf32>
    %8 = tpu.matmul %3, %4, %cst_4 {dimension_numbers = #tpu.dot_dimension_numbers<[1], [1], [0], [0], [0, 0, 1, 0], [], []>} : vector<8x32xf32>, vector<128x32xf32>, vector<8x128xf32> -> vector<8x128xf32>
    %c0_5 = arith.constant 0 : index
    %c0_6 = arith.constant 0 : index
    %9 = vector.load %arg7[%c0_5, %c0_6] : memref<8x128xf32, #tpu.memory_space<vmem>>, vector<8x128xf32>
    %cst_7 = arith.constant 2.000000e+00 : f32
    %10 = vector.broadcast %cst_7 : f32 to vector<8x128xf32>
    %11 = arith.mulf %10, %8 : vector<8x128xf32>
    %12 = vector.broadcast %7 : vector<8x1xf32> to vector<8x128xf32>
    %13 = arith.subf %12, %11 : vector<8x128xf32>
    %14 = arith.addf %9, %13 : vector<8x128xf32>
    %c0_8 = arith.constant 0 : index
    %c0_9 = arith.constant 0 : index
    %15 = vector.load %arg7[%c0_8, %c0_9] : memref<8x128xf32, #tpu.memory_space<vmem>>, vector<8x128xf32>
    tpu.vector_store %arg7[%c0_8, %c0_9], %14 {strides = array<i32>} : memref<8x128xf32, #tpu.memory_space<vmem>>, vector<8x128xf32>,
    %c0_i32_10 = arith.constant 0 : i32
    %16 = arith.cmpi eq, %arg2, %c0_i32_10 : i32
    %17 = arith.extui %16 : i1 to i32
    %c0_i32_11 = arith.constant 0 : i32
    %18 = arith.cmpi ne, %17, %c0_i32_11 : i32
    scf.if %18 {
      %c0_12 = arith.constant 0 : index
      %c0_13 = arith.constant 0 : index
      %19 = vector.load %arg7[%c0_12, %c0_13] : memref<8x128xf32, #tpu.memory_space<vmem>>, vector<8x128xf32>
      %c0_14 = arith.constant 0 : index
      %c0_15 = arith.constant 0 : index
      %20 = vector.load %arg5[%c0_14, %c0_15] : memref<1x128xf32, #tpu.memory_space<vmem>>, vector<1x128xf32>
      %21 = vector.broadcast %20 : vector<1x128xf32> to vector<8x128xf32>
      %22 = arith.addf %19, %21 : vector<8x128xf32>
      %cst_16 = arith.constant 0.000000e+00 : f32
      %23 = vector.broadcast %cst_16 : f32 to vector<8x128xf32>
      %24 = arith.maximumf %22, %23 : vector<8x128xf32>
      %cst_17 = arith.constant 1.000000e+00 : f32
      %25 = vector.broadcast %cst_17 : f32 to vector<8x128xf32>
      %26 = arith.mulf %24, %25 : vector<8x128xf32>
      %cst_18 = arith.constant 1.000000e+00 : f32
      %27 = vector.broadcast %cst_18 : f32 to vector<8x128xf32>
      %28 = arith.addf %27, %26 : vector<8x128xf32>
      %29 = tpu.reciprocal %28 : vector<8x128xf32> -> vector<8x128xf32>
      %c0_19 = arith.constant 0 : index
      %c0_20 = arith.constant 0 : index
      %30 = vector.load %arg6[%c0_19, %c0_20] : memref<8x128xf32, #tpu.memory_space<vmem>>, vector<8x128xf32>
      tpu.vector_store %arg6[%c0_19, %c0_20], %29 {strides = array<i32>} : memref<8x128xf32, #tpu.memory_space<vmem>>, vector<8x128xf32>,
    } else {
    }
    return
  }
  func.func @transform_0(%arg0: i32, %arg1: i32, %arg2: i32) -> (i32, i32) {
    %c0_i32 = arith.constant 0 : i32
    return %arg1, %arg2 : i32, i32
  }
  func.func @transform_1(%arg0: i32, %arg1: i32, %arg2: i32) -> (i32, i32) {
    %c0_i32 = arith.constant 0 : i32
    return %arg0, %arg2 : i32, i32
  }
  func.func @transform_2(%arg0: i32, %arg1: i32, %arg2: i32) -> (i32, i32) {
    %c0_i32 = arith.constant 0 : i32
    %c0_i32_0 = arith.constant 0 : i32
    return %c0_i32, %arg0 : i32, i32
  }
  func.func @transform_3(%arg0: i32, %arg1: i32, %arg2: i32) -> (i32, i32) {
    %c0_i32 = arith.constant 0 : i32
    return %arg1, %arg0 : i32, i32
  }
}

module attributes {stable_mosaic.version = 11 : i64} {
  func.func @_prototype_kernel(%arg0: i32, %arg1: i32, %arg2: i32, %arg3: memref<8x32xf32, #tpu.memory_space<vmem>>, %arg4: memref<128x32xf32, #tpu.memory_space<vmem>>, %arg5: memref<1x128xf32, #tpu.memory_space<vmem>>, %arg6: memref<8x128xf32, #tpu.memory_space<vmem>>, %arg7: memref<8x128xf32, #tpu.memory_space<vmem>>) attributes {dimension_semantics = [#tpu.dimension_semantics<parallel>, #tpu.dimension_semantics<parallel>, #tpu.dimension_semantics<arbitrary>], iteration_bounds = array<i64: 1, 1, 1>, scalar_prefetch = 0 : i64, scratch_operands = 1 : i64, tpu.core_type = #tpu.core_type<tc>, window_params = [{transform_indices = @transform_0, window_bounds = array<i64: 8, 32>}, {transform_indices = @transform_1, window_bounds = array<i64: 128, 32>}, {transform_indices = @transform_2, window_bounds = array<i64: 1, 128>}, {transform_indices = @transform_3, window_bounds = array<i64: 8, 128>}]} {
    %c0_i32 = arith.constant 0 : i32
    %0 = arith.cmpi eq, %arg2, %c0_i32 : i32
    %1 = arith.extui %0 : i1 to i32
    %c0_i32_0 = arith.constant 0 : i32
    %2 = arith.cmpi ne, %1, %c0_i32_0 : i32
    scf.if %2 {
      %cst_12 = arith.constant 0.000000e+00 : f32
      %19 = vector.broadcast %cst_12 : f32 to vector<8x128xf32>
      %c0_13 = arith.constant 0 : index
      %c0_14 = arith.constant 0 : index
      %20 = vector.load %arg7[%c0_13, %c0_14] : memref<8x128xf32, #tpu.memory_space<vmem>>, vector<8x128xf32>
      tpu.vector_store %arg7[%c0_13, %c0_14], %19 {strides = array<i32>} : memref<8x128xf32, #tpu.memory_space<vmem>>, vector<8x128xf32>,
    } else {
    }
    %c0 = arith.constant 0 : index
    %c0_1 = arith.constant 0 : index
    %3 = vector.load %arg3[%c0, %c0_1] : memref<8x32xf32, #tpu.memory_space<vmem>>, vector<8x32xf32>
    %c0_2 = arith.constant 0 : index
    %c0_3 = arith.constant 0 : index
    %4 = vector.load %arg4[%c0_2, %c0_3] : memref<128x32xf32, #tpu.memory_space<vmem>>, vector<128x32xf32>
    %5 = arith.mulf %3, %3 : vector<8x32xf32>
    %cst = arith.constant dense<0.000000e+00> : vector<8xf32>
    %6 = vector.multi_reduction <add>, %5, %cst [1] : vector<8x32xf32> to vector<8xf32>
    %7 = vector.shape_cast %6 : vector<8xf32> to vector<8x1xf32>
    %cst_4 = arith.constant dense<0.000000e+00> : vector<8x128xf32>
    %8 = tpu.matmul %3, %4, %cst_4 {dimension_numbers = #tpu.dot_dimension_numbers<[1], [1], [0], [0], [0, 0, 1, 0], [], []>} : vector<8x32xf32>, vector<128x32xf32>, vector<8x128xf32> -> vector<8x128xf32>
    %c0_5 = arith.constant 0 : index
    %c0_6 = arith.constant 0 : index
    %9 = vector.load %arg7[%c0_5, %c0_6] : memref<8x128xf32, #tpu.memory_space<vmem>>, vector<8x128xf32>
    %cst_7 = arith.constant 2.000000e+00 : f32
    %10 = vector.broadcast %cst_7 : f32 to vector<8x128xf32>
    %11 = arith.mulf %10, %8 : vector<8x128xf32>
    %12 = vector.broadcast %7 : vector<8x1xf32> to vector<8x128xf32>
    %13 = arith.subf %12, %11 : vector<8x128xf32>
    %14 = arith.addf %9, %13 : vector<8x128xf32>
    %c0_8 = arith.constant 0 : index
    %c0_9 = arith.constant 0 : index
    %15 = vector.load %arg7[%c0_8, %c0_9] : memref<8x128xf32, #tpu.memory_space<vmem>>, vector<8x128xf32>
    tpu.vector_store %arg7[%c0_8, %c0_9], %14 {strides = array<i32>} : memref<8x128xf32, #tpu.memory_space<vmem>>, vector<8x128xf32>,
    %c0_i32_10 = arith.constant 0 : i32
    %16 = arith.cmpi eq, %arg2, %c0_i32_10 : i32
    %17 = arith.extui %16 : i1 to i32
    %c0_i32_11 = arith.constant 0 : i32
    %18 = arith.cmpi ne, %17, %c0_i32_11 : i32
    scf.if %18 {
      %c0_12 = arith.constant 0 : index
      %c0_13 = arith.constant 0 : index
      %19 = vector.load %arg7[%c0_12, %c0_13] : memref<8x128xf32, #tpu.memory_space<vmem>>, vector<8x128xf32>
      %c0_14 = arith.constant 0 : index
      %c0_15 = arith.constant 0 : index
      %20 = vector.load %arg5[%c0_14, %c0_15] : memref<1x128xf32, #tpu.memory_space<vmem>>, vector<1x128xf32>
      %21 = vector.broadcast %20 : vector<1x128xf32> to vector<8x128xf32>
      %22 = arith.addf %19, %21 : vector<8x128xf32>
      %cst_16 = arith.constant 0.000000e+00 : f32
      %23 = vector.broadcast %cst_16 : f32 to vector<8x128xf32>
      %24 = arith.maximumf %22, %23 : vector<8x128xf32>
      %cst_17 = arith.constant 1.000000e+00 : f32
      %25 = vector.broadcast %cst_17 : f32 to vector<8x128xf32>
      %26 = arith.mulf %24, %25 : vector<8x128xf32>
      %cst_18 = arith.constant 1.000000e+00 : f32
      %27 = vector.broadcast %cst_18 : f32 to vector<8x128xf32>
      %28 = arith.addf %27, %26 : vector<8x128xf32>
      %29 = tpu.reciprocal %28 : vector<8x128xf32> -> vector<8x128xf32>
      %c0_19 = arith.constant 0 : index
      %c0_20 = arith.constant 0 : index
      %30 = vector.load %arg6[%c0_19, %c0_20] : memref<8x128xf32, #tpu.memory_space<vmem>>, vector<8x128xf32>
      tpu.vector_store %arg6[%c0_19, %c0_20], %29 {strides = array<i32>} : memref<8x128xf32, #tpu.memory_space<vmem>>, vector<8x128xf32>,
    } else {
    }
    return
  }
  func.func @transform_0(%arg0: i32, %arg1: i32, %arg2: i32) -> (i32, i32) {
    %c0_i32 = arith.constant 0 : i32
    return %arg1, %arg2 : i32, i32
  }
  func.func @transform_1(%arg0: i32, %arg1: i32, %arg2: i32) -> (i32, i32) {
    %c0_i32 = arith.constant 0 : i32
    return %arg0, %arg2 : i32, i32
  }
  func.func @transform_2(%arg0: i32, %arg1: i32, %arg2: i32) -> (i32, i32) {
    %c0_i32 = arith.constant 0 : i32
    %c0_i32_0 = arith.constant 0 : i32
    return %c0_i32, %arg0 : i32, i32
  }
  func.func @transform_3(%arg0: i32, %arg1: i32, %arg2: i32) -> (i32, i32) {
    %c0_i32 = arith.constant 0 : i32
    return %arg1, %arg0 : i32, i32
  }
}

</mosaic_0001>

<llo_original>
// kernel: tpu_custom_call.1
$region0: #{tpu_custom_call.1}
  #allocation0 [shape = 'u32[]', space=smem, size = 0x4, offset = 0x4, fixed_abs, tag = 'smem constant byte address 0x4 - core index']
  #allocation1 [shape = 'u32[72,128]{1,0:T(1,128)}', space=vmem, size = 0x9000, scoped, tag = 'internal scratch']
  #allocation2 [shape = 'f32[8,128]{1,0:T(8,128)}', space=vmem, size = 0x1000, scoped, tag = 'scratch operand']
  %s0 = inlined_call_operand.vmem [shape: f32[8,32], index: 0, kind: input, shape index: {}]
  %s1 = inlined_call_operand.vmem [shape: f32[128,32], index: 1, kind: input, shape index: {}]
  %s2 = inlined_call_operand.vmem [shape: f32[1,128], index: 2, kind: input, shape index: {}]
  %s3 = inlined_call_operand.hbm [shape: f32[8,128], index: 3, kind: output, shape index: {}]
  %s4 = sld [smem:[#allocation0]]
  $region30: #{tpu_custom_call.1} parent=0
    _
  %s6 = ssub.s32 1, %s4
  %s7 = scalar_select 0, %s6, %s4
  $region1: #{tpu_custom_call.1} parent=0
    #allocation3 [shape = 'u8[4096]{0}', space=vmem, size = 0x1000, scoped, tag = 'output window, operand 0, single buffered']
    #allocation4 [shape = 's32[1]{0}', space=sflag, size = 0x4, scoped, tag = 'scoped memory for tpu_custom_call.1']
    %8 = vsyncpa [#allocation4], 0
    // Predicated region
    $region2: #{tpu_custom_call.1} parent=1 // pred_check
      _
    $region3: #{tpu_custom_call.1} parent=1 // pred_check_branch
      %10 = sbr.rel (0) target = $region5
    $region4: #{tpu_custom_call.1} parent=1 // pred_region
      _
    $region5: #{tpu_custom_call.1} parent=1 // pred_fallthru
      _
    // Predicated region
    $region6: #{tpu_custom_call.1} parent=1 // pred_check
      _
    $region7: #{tpu_custom_call.1} parent=1 // pred_check_branch
      %12 = sbr.rel (0) target = $region9
    $region8: #{tpu_custom_call.1} parent=1 // pred_region
      _
    $region9: #{tpu_custom_call.1} parent=1 // pred_fallthru
      _
    // Predicated region
    $region10: #{tpu_custom_call.1} parent=1 // pred_check
      _
    $region11: #{tpu_custom_call.1} parent=1 // pred_check_branch
      %14 = sbr.rel (0) target = $region13
    $region12: #{tpu_custom_call.1} parent=1 // pred_region
      _
    $region13: #{tpu_custom_call.1} parent=1 // pred_fallthru
      _
    %p15 = scmp.eq.s32.totalorder 0, 0
    // Predicated region
    $region14: #{tpu_custom_call.1} parent=1 // pred_check
      %p16 = pneg %p15
    $region15: #{tpu_custom_call.1} parent=1 // pred_check_branch
      %18 = sbr.rel (%p16) target = $region17
    $region16: #{tpu_custom_call.1} parent=1 // pred_region
      %19 = vst [vmem:[#allocation2] sm:$0xff] 0.0
    $region17: #{tpu_custom_call.1} parent=1 // pred_fallthru
      _
    %v20 = vld [vmem:[%s0] sm:$0xff]
    %v21 = vld [vmem:[%s1] sm:$0xff]
    %v22 = vld [vmem:[%s1 + $0x8] sm:$0xff]
    %v23 = vld [vmem:[%s1 + $0x10] sm:$0xff]
    %v24 = vld [vmem:[%s1 + $0x18] sm:$0xff]
    %v25 = vld [vmem:[%s1 + $0x20] sm:$0xff]
    %v26 = vld [vmem:[%s1 + $0x28] sm:$0xff]
    %v27 = vld [vmem:[%s1 + $0x30] sm:$0xff]
    %v28 = vld [vmem:[%s1 + $0x38] sm:$0xff]
    %v29 = vld [vmem:[%s1 + $0x40] sm:$0xff]
    %v30 = vld [vmem:[%s1 + $0x48] sm:$0xff]
    %v31 = vld [vmem:[%s1 + $0x50] sm:$0xff]
    %v32 = vld [vmem:[%s1 + $0x58] sm:$0xff]
    %v33 = vld [vmem:[%s1 + $0x60] sm:$0xff]
    %v34 = vld [vmem:[%s1 + $0x68] sm:$0xff]
    %v35 = vld [vmem:[%s1 + $0x70] sm:$0xff]
    %v36 = vld [vmem:[%s1 + $0x78] sm:$0xff]
    %v37 = vmul.f32 %v20, %v20
    %vm38 = vcmask 261120
    %v39 = vsel %vm38, %v37, 0.0
    %40 = vadd.xlane.f32.xlu0 %v39
    %v41 = vpop.xlane.xlu0 %40
    %v43 = vsel %vm38, %v20, 0
    %v46 = vsel %vm38, %v21, 0
    %v49 = vsel %vm38, %v22, 0
    %v52 = vsel %vm38, %v23, 0
    %v55 = vsel %vm38, %v24, 0
    %v58 = vsel %vm38, %v25, 0
    %v61 = vsel %vm38, %v26, 0
    %v64 = vsel %vm38, %v27, 0
    %v67 = vsel %vm38, %v28, 0
    %v70 = vsel %vm38, %v29, 0
    %v73 = vsel %vm38, %v30, 0
    %v76 = vsel %vm38, %v31, 0
    %v79 = vsel %vm38, %v32, 0
    %v82 = vsel %vm38, %v33, 0
    %v85 = vsel %vm38, %v34, 0
    %v88 = vsel %vm38, %v35, 0
    %v91 = vsel %vm38, %v36, 0
    %93 = vmatpush.xpose.msra.mxu0 %v91
    %94 = vmatpush.xpose.msra.mxu0 %v88
    %95 = vmatpush.xpose.msra.mxu0 %v85
    %96 = vmatpush.xpose.msra.mxu0 %v82
    %97 = vmatpush.xpose.msra.mxu0 %v79
    %98 = vmatpush.xpose.msra.mxu0 %v76
    %99 = vmatpush.xpose.msra.mxu0 %v73
    %100 = vmatpush.xpose.msra.mxu0 %v70
    %101 = vmatpush.xpose.msra.mxu0 %v67
    %102 = vmatpush.xpose.msra.mxu0 %v64
    %103 = vmatpush.xpose.msra.mxu0 %v61
    %104 = vmatpush.xpose.msra.mxu0 %v58
    %105 = vmatpush.xpose.msra.mxu0 %v55
    %106 = vmatpush.xpose.msra.mxu0 %v52
    %107 = vmatpush.xpose.msra.mxu0 %v49
    %108 = vmatpush.xpose.msra.mxu0 %v46
    %109 = vmatmul.f32.gmra.mxu0 %v43
    %v110 = vpop.f32.mrf.mxu0
    %v111 = vadd.f32 0.0, %v110
    %112 = vdwg.mxu0
    %v113 = vld [vmem:[#allocation2] sm:$0xff]
    %v114 = vmul.f32 %v111, 2.0
    %v115 = vsub.f32 %v41, %v114
    %v116 = vadd.f32 %v113, %v115
    %117 = vst [vmem:[#allocation2] sm:$0xff] %v116
    // Predicated region
    $region18: #{tpu_custom_call.1} parent=1 // pred_check
      %p118 = pneg %p15
    $region19: #{tpu_custom_call.1} parent=1 // pred_check_branch
      %120 = sbr.rel (%p118) target = $region21
    $region20: #{tpu_custom_call.1} parent=1 // pred_region
      %v121 = vld [vmem:[#allocation2] sm:$0xff]
      %v122 = vld [vmem:[%s2] sm:$0x1]
      %v124 = vperm.slane %v122, 0
      %v126 = vadd.f32 %v121, %v124
      %v127 = vmax.f32 %v126, 0.0
      %v128 = vadd.f32 %v127, 1.0
      %v129 = vrcp.pop %v128
      %v130 = vmul.f32 %v128, %v129
      %v131 = vsub.f32 1.0, %v130
      %v132 = vmul.f32 %v129, %v131
      %v133 = vadd.f32 %v129, %v132
      %vm134 = vweird.f32 %v128
      %vm135 = vweird.f32 %v129
      %vm136 = vmor %vm134, %vm135
      %v137 = vsel %vm136, %v129, %v133
      %v138 = vand.u32 2147483647, %v128
      %vm139 = vcmp.eq.f32.partialorder %v138, 8.507059e+37
      %v140 = vand.u32 %v128, 2147483648
      %v141 = vor.u32 1.1754944e-38, %v140
      %v142 = vsel %vm139, %v141, %v137
      %143 = vst [vmem:[#allocation3] sm:$0xff] %v142
    $region21: #{tpu_custom_call.1} parent=1 // pred_fallthru
      _
    // Predicated region
    $region22: #{tpu_custom_call.1} parent=1 // pred_check
      _
    $region23: #{tpu_custom_call.1} parent=1 // pred_check_branch
      %145 = sbr.rel (0) target = $region25
    $region24: #{tpu_custom_call.1} parent=1 // pred_region
      %147 = vsyncadd [#allocation4], 0
      %s149 = sshll.u32 [#allocation3], 4
      %s150 = int_to_ptr.vmem [resolvable:$true] %s149
      %s151 = sshll.u32 %s3, 4
      %s152 = int_to_ptr.hbm [resolvable:$true] %s151
      %154 = dma.vmem_to_hbm [thread:$0]  %s150, 128, %s152, [#allocation4]
    $region25: #{tpu_custom_call.1} parent=1 // pred_fallthru
      _
    // Predicated region
    $region26: #{tpu_custom_call.1} parent=1 // pred_check
      _
    $region27: #{tpu_custom_call.1} parent=1 // pred_check_branch
      %156 = sbr.rel (0) target = $region29
    $region28: #{tpu_custom_call.1} parent=1 // pred_region
      %158 = dma.done [#allocation4], 128
    $region29: #{tpu_custom_call.1} parent=1 // pred_fallthru
      _
    %159 = vsyncpa [#allocation4], 1

// kernel: tpu_custom_call.1
$region0: #{tpu_custom_call.1}
  #allocation0 [shape = 'u32[]', space=smem, size = 0x4, offset = 0x4, fixed_abs, tag = 'smem constant byte address 0x4 - core index']
  #allocation1 [shape = 'u32[72,128]{1,0:T(1,128)}', space=vmem, size = 0x9000, scoped, tag = 'internal scratch']
  #allocation2 [shape = 'f32[8,128]{1,0:T(8,128)}', space=vmem, size = 0x1000, scoped, tag = 'scratch operand']
  %s0 = inlined_call_operand.vmem [shape: f32[8,32], index: 0, kind: input, shape index: {}]
  %s1 = inlined_call_operand.vmem [shape: f32[128,32], index: 1, kind: input, shape index: {}]
  %s2 = inlined_call_operand.vmem [shape: f32[1,128], index: 2, kind: input, shape index: {}]
  %s3 = inlined_call_operand.hbm [shape: f32[8,128], index: 3, kind: output, shape index: {}]
  %s4 = sld [smem:[#allocation0]]
  $region30: #{tpu_custom_call.1} parent=0
    _
  %s6 = ssub.s32 1, %s4
  %s7 = scalar_select 0, %s6, %s4
  $region1: #{tpu_custom_call.1} parent=0
    #allocation3 [shape = 'u8[4096]{0}', space=vmem, size = 0x1000, scoped, tag = 'output window, operand 0, single buffered']
    #allocation4 [shape = 's32[1]{0}', space=sflag, size = 0x4, scoped, tag = 'scoped memory for tpu_custom_call.1']
    %8 = vsyncpa [#allocation4], 0
    // Predicated region
    $region2: #{tpu_custom_call.1} parent=1 // pred_check
      _
    $region3: #{tpu_custom_call.1} parent=1 // pred_check_branch
      %10 = sbr.rel (0) target = $region5
    $region4: #{tpu_custom_call.1} parent=1 // pred_region
      _
    $region5: #{tpu_custom_call.1} parent=1 // pred_fallthru
      _
    // Predicated region
    $region6: #{tpu_custom_call.1} parent=1 // pred_check
      _
    $region7: #{tpu_custom_call.1} parent=1 // pred_check_branch
      %12 = sbr.rel (0) target = $region9
    $region8: #{tpu_custom_call.1} parent=1 // pred_region
      _
    $region9: #{tpu_custom_call.1} parent=1 // pred_fallthru
      _
    // Predicated region
    $region10: #{tpu_custom_call.1} parent=1 // pred_check
      _
    $region11: #{tpu_custom_call.1} parent=1 // pred_check_branch
      %14 = sbr.rel (0) target = $region13
    $region12: #{tpu_custom_call.1} parent=1 // pred_region
      _
    $region13: #{tpu_custom_call.1} parent=1 // pred_fallthru
      _
    %p15 = scmp.eq.s32.totalorder 0, 0
    // Predicated region
    $region14: #{tpu_custom_call.1} parent=1 // pred_check
      %p16 = pneg %p15
    $region15: #{tpu_custom_call.1} parent=1 // pred_check_branch
      %18 = sbr.rel (%p16) target = $region17
    $region16: #{tpu_custom_call.1} parent=1 // pred_region
      %19 = vst [vmem:[#allocation2] sm:$0xff] 0.0
    $region17: #{tpu_custom_call.1} parent=1 // pred_fallthru
      _
    %v20 = vld [vmem:[%s0] sm:$0xff]
    %v21 = vld [vmem:[%s1] sm:$0xff]
    %v22 = vld [vmem:[%s1 + $0x8] sm:$0xff]
    %v23 = vld [vmem:[%s1 + $0x10] sm:$0xff]
    %v24 = vld [vmem:[%s1 + $0x18] sm:$0xff]
    %v25 = vld [vmem:[%s1 + $0x20] sm:$0xff]
    %v26 = vld [vmem:[%s1 + $0x28] sm:$0xff]
    %v27 = vld [vmem:[%s1 + $0x30] sm:$0xff]
    %v28 = vld [vmem:[%s1 + $0x38] sm:$0xff]
    %v29 = vld [vmem:[%s1 + $0x40] sm:$0xff]
    %v30 = vld [vmem:[%s1 + $0x48] sm:$0xff]
    %v31 = vld [vmem:[%s1 + $0x50] sm:$0xff]
    %v32 = vld [vmem:[%s1 + $0x58] sm:$0xff]
    %v33 = vld [vmem:[%s1 + $0x60] sm:$0xff]
    %v34 = vld [vmem:[%s1 + $0x68] sm:$0xff]
    %v35 = vld [vmem:[%s1 + $0x70] sm:$0xff]
    %v36 = vld [vmem:[%s1 + $0x78] sm:$0xff]
    %v37 = vmul.f32 %v20, %v20
    %vm38 = vcmask 261120
    %v39 = vsel %vm38, %v37, 0.0
    %40 = vadd.xlane.f32.xlu0 %v39
    %v41 = vpop.xlane.xlu0 %40
    %v43 = vsel %vm38, %v20, 0
    %v46 = vsel %vm38, %v21, 0
    %v49 = vsel %vm38, %v22, 0
    %v52 = vsel %vm38, %v23, 0
    %v55 = vsel %vm38, %v24, 0
    %v58 = vsel %vm38, %v25, 0
    %v61 = vsel %vm38, %v26, 0
    %v64 = vsel %vm38, %v27, 0
    %v67 = vsel %vm38, %v28, 0
    %v70 = vsel %vm38, %v29, 0
    %v73 = vsel %vm38, %v30, 0
    %v76 = vsel %vm38, %v31, 0
    %v79 = vsel %vm38, %v32, 0
    %v82 = vsel %vm38, %v33, 0
    %v85 = vsel %vm38, %v34, 0
    %v88 = vsel %vm38, %v35, 0
    %v91 = vsel %vm38, %v36, 0
    %93 = vmatpush.xpose.msra.mxu0 %v91
    %94 = vmatpush.xpose.msra.mxu0 %v88
    %95 = vmatpush.xpose.msra.mxu0 %v85
    %96 = vmatpush.xpose.msra.mxu0 %v82
    %97 = vmatpush.xpose.msra.mxu0 %v79
    %98 = vmatpush.xpose.msra.mxu0 %v76
    %99 = vmatpush.xpose.msra.mxu0 %v73
    %100 = vmatpush.xpose.msra.mxu0 %v70
    %101 = vmatpush.xpose.msra.mxu0 %v67
    %102 = vmatpush.xpose.msra.mxu0 %v64
    %103 = vmatpush.xpose.msra.mxu0 %v61
    %104 = vmatpush.xpose.msra.mxu0 %v58
    %105 = vmatpush.xpose.msra.mxu0 %v55
    %106 = vmatpush.xpose.msra.mxu0 %v52
    %107 = vmatpush.xpose.msra.mxu0 %v49
    %108 = vmatpush.xpose.msra.mxu0 %v46
    %109 = vmatmul.f32.gmra.mxu0 %v43
    %v110 = vpop.f32.mrf.mxu0
    %v111 = vadd.f32 0.0, %v110
    %112 = vdwg.mxu0
    %v113 = vld [vmem:[#allocation2] sm:$0xff]
    %v114 = vmul.f32 %v111, 2.0
    %v115 = vsub.f32 %v41, %v114
    %v116 = vadd.f32 %v113, %v115
    %117 = vst [vmem:[#allocation2] sm:$0xff] %v116
    // Predicated region
    $region18: #{tpu_custom_call.1} parent=1 // pred_check
      %p118 = pneg %p15
    $region19: #{tpu_custom_call.1} parent=1 // pred_check_branch
      %120 = sbr.rel (%p118) target = $region21
    $region20: #{tpu_custom_call.1} parent=1 // pred_region
      %v121 = vld [vmem:[#allocation2] sm:$0xff]
      %v122 = vld [vmem:[%s2] sm:$0x1]
      %v124 = vperm.slane %v122, 0
      %v126 = vadd.f32 %v121, %v124
      %v127 = vmax.f32 %v126, 0.0
      %v128 = vadd.f32 %v127, 1.0
      %v129 = vrcp.pop %v128
      %v130 = vmul.f32 %v128, %v129
      %v131 = vsub.f32 1.0, %v130
      %v132 = vmul.f32 %v129, %v131
      %v133 = vadd.f32 %v129, %v132
      %vm134 = vweird.f32 %v128
      %vm135 = vweird.f32 %v129
      %vm136 = vmor %vm134, %vm135
      %v137 = vsel %vm136, %v129, %v133
      %v138 = vand.u32 2147483647, %v128
      %vm139 = vcmp.eq.f32.partialorder %v138, 8.507059e+37
      %v140 = vand.u32 %v128, 2147483648
      %v141 = vor.u32 1.1754944e-38, %v140
      %v142 = vsel %vm139, %v141, %v137
      %143 = vst [vmem:[#allocation3] sm:$0xff] %v142
    $region21: #{tpu_custom_call.1} parent=1 // pred_fallthru
      _
    // Predicated region
    $region22: #{tpu_custom_call.1} parent=1 // pred_check
      _
    $region23: #{tpu_custom_call.1} parent=1 // pred_check_branch
      %145 = sbr.rel (0) target = $region25
    $region24: #{tpu_custom_call.1} parent=1 // pred_region
      %147 = vsyncadd [#allocation4], 0
      %s149 = sshll.u32 [#allocation3], 4
      %s150 = int_to_ptr.vmem [resolvable:$true] %s149
      %s151 = sshll.u32 %s3, 4
      %s152 = int_to_ptr.hbm [resolvable:$true] %s151
      %154 = dma.vmem_to_hbm [thread:$0]  %s150, 128, %s152, [#allocation4]
    $region25: #{tpu_custom_call.1} parent=1 // pred_fallthru
      _
    // Predicated region
    $region26: #{tpu_custom_call.1} parent=1 // pred_check
      _
    $region27: #{tpu_custom_call.1} parent=1 // pred_check_branch
      %156 = sbr.rel (0) target = $region29
    $region28: #{tpu_custom_call.1} parent=1 // pred_region
      %158 = dma.done [#allocation4], 128
    $region29: #{tpu_custom_call.1} parent=1 // pred_fallthru
      _
    %159 = vsyncpa [#allocation4], 1

</llo_original>
